<compile_context>
chip_gen: v7x
topology: tpu7x:2x2x1
jax: 0.10.0
libtpu: 0.0.40
codegen_flags: <defaults>
</compile_context>

<pallas_src>
import jax
import jax.numpy as jnp
from jax import lax
from jax.experimental import pallas as pl
from jax.experimental.pallas import tpu as pltpu

_VMEM_LIMIT = 48 << 20  # < v7x 64 MiB physical, >= 16/32 MiB scoped defaults on v5e/v6e


# ----------------------------------------------------------------------------
# helpers
# ----------------------------------------------------------------------------
def _pick_row_tile(m, row_elems, target_bytes=4 << 20, max_rows=32768):
    """Rows per block: ~target_bytes for the widest f32 operand block, a multiple
    of 8, capped so the 1-D grid keeps >= 2 steps (v7x megacore)."""
    rows = max(8, target_bytes // max(int(row_elems) * 4, 1))
    rows = min(rows, max_rows, m)
    half = -(-m // 2)
    if m > 8 and rows > half:
        rows = half
    rows = max(8, (rows // 8) * 8)
    return int(rows)


def _pad_rows(a, mult):
    m = a.shape[0]
    mp = -(-m // mult) * mult
    if mp != m:
        a = jnp.pad(a, ((0, mp - m),) + ((0, 0),) * (a.ndim - 1))
    return a, mp


def _im2col_3x3(x_nhwc):
    """(B,H,W,C) -> (B*H*W, 9*C) patches for a 3x3, stride-1, pad-1 conv."""
    b, h, w, c = x_nhwc.shape
    xp = jnp.pad(x_nhwc, ((0, 0), (1, 1), (1, 1), (0, 0)))
    cols = [xp[:, ky:ky + h, kx:kx + w, :] for ky in range(3) for kx in range(3)]
    return jnp.concatenate(cols, axis=-1).reshape(b * h * w, 9 * c)


# ----------------------------------------------------------------------------
# Pallas kernels
# ----------------------------------------------------------------------------
def _conv_matmul_stats_kernel(x_ref, w_ref, y_ref, s_ref, q_ref):
    # x_ref: (TM, K)  w_ref: (K, N)  y_ref: (TM, N)  s_ref/q_ref: (1, 8, N)
    y = jnp.dot(x_ref[...], w_ref[...], preferred_element_type=jnp.float32)
    y_ref[...] = y.astype(y_ref.dtype)
    n = s_ref.shape[-1]
    s = jnp.sum(y, axis=0, keepdims=True)          # (1, N) partial channel sum
    q = jnp.sum(y * y, axis=0, keepdims=True)      # (1, N) partial sum of squares
    s_ref[...] = jnp.broadcast_to(s.reshape(1, 1, n), (1, 8, n))
    q_ref[...] = jnp.broadcast_to(q.reshape(1, 1, n), (1, 8, n))


def _bn_relu_kernel(y_ref, a_ref, b_ref, o_ref):
    # out = relu(y * a + b)  (a, b are the folded BN scale/shift per channel)
    o_ref[...] = jnp.maximum(y_ref[...] * a_ref[...] + b_ref[...], 0.0)


def _bn_add_relu_kernel(y_ref, a_ref, b_ref, id_ref, o_ref):
    # out = relu(y * a + b + identity)
    o_ref[...] = jnp.maximum(y_ref[...] * a_ref[...] + b_ref[...] + id_ref[...], 0.0)


def _bn_projadd_relu_kernel(y_ref, a_ref, b_ref, x_ref, wp_ref, bp_ref, o_ref):
    # out = relu(y * a + b + (x @ Wproj + bproj))   -- fused 1x1 projection shortcut
    ident = jnp.dot(x_ref[...], wp_ref[...], preferred_element_type=jnp.float32) + bp_ref[...]
    o_ref[...] = jnp.maximum(y_ref[...] * a_ref[...] + b_ref[...] + ident, 0.0)


# ----------------------------------------------------------------------------
# pallas_call wrappers
# ----------------------------------------------------------------------------
def _compiler_params():
    return pltpu.CompilerParams(dimension_semantics=("parallel",),
                                vmem_limit_bytes=_VMEM_LIMIT)


def _conv_matmul_stats(x2d, w2d):
    """y = x2d @ w2d, plus per-block partial per-channel sum / sum-of-squares."""
    m, k = x2d.shape
    n = w2d.shape[1]
    tm = _pick_row_tile(m, max(k, n))
    x2d, mp = _pad_rows(x2d, tm)          # padded rows are zero -> contribute 0 to stats
    nb = mp // tm

    y, s, q = pl.pallas_call(
        _conv_matmul_stats_kernel,
        out_shape=(jax.ShapeDtypeStruct((mp, n), jnp.float32),
                   jax.ShapeDtypeStruct((nb, 8, n), jnp.float32),
                   jax.ShapeDtypeStruct((nb, 8, n), jnp.float32)),
        grid=(nb,),
        in_specs=[pl.BlockSpec((tm, k), lambda i: (i, 0)),
                  pl.BlockSpec((k, n), lambda i: (0, 0))],
        out_specs=(pl.BlockSpec((tm, n), lambda i: (i, 0)),
                   pl.BlockSpec((1, 8, n), lambda i: (i, 0, 0)),
                   pl.BlockSpec((1, 8, n), lambda i: (i, 0, 0))),
        compiler_params=_compiler_params(),
    )(x2d, w2d)
    return y[:m], s[:, 0, :], q[:, 0, :]


def _bn_relu(y2d, a, b):
    m, n = y2d.shape
    tm = _pick_row_tile(m, n)
    y2d, mp = _pad_rows(y2d, tm)
    nb = mp // tm
    out = pl.pallas_call(
        _bn_relu_kernel,
        out_shape=jax.ShapeDtypeStruct((mp, n), jnp.float32),
        grid=(nb,),
        in_specs=[pl.BlockSpec((tm, n), lambda i: (i, 0)),
                  pl.BlockSpec((1, n), lambda i: (0, 0)),
                  pl.BlockSpec((1, n), lambda i: (0, 0))],
        out_specs=pl.BlockSpec((tm, n), lambda i: (i, 0)),
        compiler_params=_compiler_params(),
    )(y2d, a.reshape(1, n).astype(jnp.float32), b.reshape(1, n).astype(jnp.float32))
    return out[:m]


def _bn_add_relu(y2d, a, b, identity2d=None, x2d=None, wp2d=None, bproj=None):
    m, n = y2d.shape
    a2 = a.reshape(1, n).astype(jnp.float32)
    b2 = b.reshape(1, n).astype(jnp.float32)
    widest = n if wp2d is None else max(n, wp2d.shape[0])
    tm = _pick_row_tile(m, widest)
    y2d, mp = _pad_rows(y2d, tm)
    nb = mp // tm

    if wp2d is None:
        identity2d, _ = _pad_rows(identity2d, tm)
        out = pl.pallas_call(
            _bn_add_relu_kernel,
            out_shape=jax.ShapeDtypeStruct((mp, n), jnp.float32),
            grid=(nb,),
            in_specs=[pl.BlockSpec((tm, n), lambda i: (i, 0)),
                      pl.BlockSpec((1, n), lambda i: (0, 0)),
                      pl.BlockSpec((1, n), lambda i: (0, 0)),
                      pl.BlockSpec((tm, n), lambda i: (i, 0))],
            out_specs=pl.BlockSpec((tm, n), lambda i: (i, 0)),
            compiler_params=_compiler_params(),
        )(y2d, a2, b2, identity2d)
    else:
        cin = wp2d.shape[0]
        x2d, _ = _pad_rows(x2d, tm)
        bp2 = bproj.reshape(1, n).astype(jnp.float32)
        out = pl.pallas_call(
            _bn_projadd_relu_kernel,
            out_shape=jax.ShapeDtypeStruct((mp, n), jnp.float32),
            grid=(nb,),
            in_specs=[pl.BlockSpec((tm, n), lambda i: (i, 0)),
                      pl.BlockSpec((1, n), lambda i: (0, 0)),
                      pl.BlockSpec((1, n), lambda i: (0, 0)),
                      pl.BlockSpec((tm, cin), lambda i: (i, 0)),
                      pl.BlockSpec((cin, n), lambda i: (0, 0)),
                      pl.BlockSpec((1, n), lambda i: (0, 0))],
            out_specs=pl.BlockSpec((tm, n), lambda i: (i, 0)),
            compiler_params=_compiler_params(),
        )(y2d, a2, b2, x2d, wp2d, bp2)
    return out[:m]


# ----------------------------------------------------------------------------
# ResidualBlock forward (Pallas path)
# ----------------------------------------------------------------------------
def residual_block_forward(x, w1, gamma1, beta1, w2, gamma2, beta2,
                           wp=None, bp=None, *, stride=1, eps=1e-5):
    """x: (B, Cin, H, W); w1: (P, Cin, 3, 3); w2: (P, P, 3, 3);
    wp/bp: optional 1x1 projection (P, Cin, 1, 1) / (P,)."""
    # TODO(synk): stride != 1 unsupported; the original module's residual add only
    # type-checks for stride == 1 anyway (spatial shapes would mismatch otherwise).
    assert stride == 1
    b, cin, h, w = x.shape
    planes = w1.shape[0]
    m = b * h * w

    x_nhwc = jnp.transpose(x, (0, 2, 3, 1)).astype(jnp.float32)

    # conv1 (+ per-channel batch statistics emitted from the same kernel)
    xcol1 = _im2col_3x3(x_nhwc)
    w1col = jnp.transpose(w1, (2, 3, 1, 0)).reshape(9 * cin, planes).astype(jnp.float32)
    y1, s1, q1 = _conv_matmul_stats(xcol1, w1col)
    mean1 = jnp.sum(s1, axis=0) / m
    var1 = jnp.maximum(jnp.sum(q1, axis=0) / m - mean1 * mean1, 0.0)   # biased var
    a1 = gamma1 * lax.rsqrt(var1 + eps)
    b1 = beta1 - mean1 * a1

    # bn1 + relu (folded affine)
    z1 = _bn_relu(y1, a1, b1)

    # conv2 (+ stats)
    xcol2 = _im2col_3x3(z1.reshape(b, h, w, planes))
    w2col = jnp.transpose(w2, (2, 3, 1, 0)).reshape(9 * planes, planes).astype(jnp.float32)
    y2, s2, q2 = _conv_matmul_stats(xcol2, w2col)
    mean2 = jnp.sum(s2, axis=0) / m
    var2 = jnp.maximum(jnp.sum(q2, axis=0) / m - mean2 * mean2, 0.0)
    a2 = gamma2 * lax.rsqrt(var2 + eps)
    b2 = beta2 - mean2 * a2

    # bn2 + residual add (+ fused 1x1 projection when Cin != planes) + relu
    x2d = x_nhwc.reshape(m, cin)
    if wp is None:
        out2d = _bn_add_relu(y2, a2, b2, identity2d=x2d)
    else:
        wp2d = wp[:, :, 0, 0].T.astype(jnp.float32)        # (Cin, P)
        out2d = _bn_add_relu(y2, a2, b2, x2d=x2d, wp2d=wp2d, bproj=bp)

    return out2d.reshape(b, h, w, planes).transpose(0, 3, 1, 2)


# ----------------------------------------------------------------------------
# Pure-JAX reference (matches the PyTorch forward in default training mode)
# ----------------------------------------------------------------------------
def residual_block_ref(x, w1, gamma1, beta1, w2, gamma2, beta2,
                       wp=None, bp=None, *, eps=1e-5):
    dn = lax.conv_dimension_numbers(x.shape, w1.shape, ('NCHW', 'OIHW', 'NCHW'))

    def bn(y, g, bta):
        mean = jnp.mean(y, axis=(0, 2, 3), keepdims=True)
        var = jnp.var(y, axis=(0, 2, 3), keepdims=True)    # biased, as PyTorch uses for normalization
        return (y - mean) * lax.rsqrt(var + eps) * g[None, :, None, None] + bta[None, :, None, None]

    y1 = lax.conv_general_dilated(x, w1, (1, 1), ((1, 1), (1, 1)), dimension_numbers=dn)
    z1 = jnp.maximum(bn(y1, gamma1, beta1), 0.0)
    y2 = lax.conv_general_dilated(z1, w2, (1, 1), ((1, 1), (1, 1)), dimension_numbers=dn)
    hh = bn(y2, gamma2, beta2)
    if wp is None:
        ident = x
    else:
        dnp = lax.conv_dimension_numbers(x.shape, wp.shape, ('NCHW', 'OIHW', 'NCHW'))
        ident = lax.conv_general_dilated(x, wp, (1, 1), ((0, 0), (0, 0)),
                                         dimension_numbers=dnp) + bp[None, :, None, None]
    return jnp.maximum(hh + ident, 0.0)


# ----------------------------------------------------------------------------
if __name__ == "__main__":
    key = jax.random.PRNGKey(0)
    B, H, W = 2, 16, 16

    def run_case(cin, planes, k):
        ks = jax.random.split(k, 9)
        x = jax.random.normal(ks[0], (B, cin, H, W), jnp.float32)
        w1 = 0.1 * jax.random.normal(ks[1], (planes, cin, 3, 3), jnp.float32)
        w2 = 0.1 * jax.random.normal(ks[2], (planes, planes, 3, 3), jnp.float32)
        g1 = 1.0 + 0.1 * jax.random.normal(ks[3], (planes,), jnp.float32)
        b1 = 0.1 * jax.random.normal(ks[4], (planes,), jnp.float32)
        g2 = 1.0 + 0.1 * jax.random.normal(ks[5], (planes,), jnp.float32)
        b2 = 0.1 * jax.random.normal(ks[6], (planes,), jnp.float32)
        if cin == planes:
            wp, bp = None, None
        else:
            wp = 0.1 * jax.random.normal(ks[7], (planes, cin, 1, 1), jnp.float32)
            bp = 0.1 * jax.random.normal(ks[8], (planes,), jnp.float32)

        out = residual_block_forward(x, w1, g1, b1, w2, g2, b2, wp, bp)
        out = jax.block_until_ready(out)
        ref = residual_block_ref(x, w1, g1, b1, w2, g2, b2, wp, bp)
        assert out.shape == (B, planes, H, W)
        assert jnp.allclose(out, ref, atol=1e-3, rtol=1e-3), \
            f"mismatch (cin={cin}, planes={planes}): max abs err {jnp.max(jnp.abs(out - ref))}"

    k1, k2 = jax.random.split(key)
    run_case(4, 4, k1)   # identity shortcut (self.W is None)
    run_case(4, 8, k2)   # 1x1 projection shortcut (self.W present, with bias)
    print("KERNEL_OK")
</pallas_src>

<mosaic_0001>
module attributes {stable_mosaic.version = 11 : i64} {
  func.func @_conv_matmul_stats_kernel(%arg0: i32, %arg1: memref<256x36xf32, #tpu.memory_space<vmem>>, %arg2: memref<36x4xf32, #tpu.memory_space<vmem>>, %arg3: memref<256x4xf32, #tpu.memory_space<vmem>>, %arg4: memref<1x8x4xf32, #tpu.memory_space<vmem>>, %arg5: memref<1x8x4xf32, #tpu.memory_space<vmem>>) attributes {dimension_semantics = [#tpu.dimension_semantics<parallel>], iteration_bounds = array<i64: 2>, scalar_prefetch = 0 : i64, scratch_operands = 0 : i64, tpu.core_type = #tpu.core_type<tc>, window_params = [{transform_indices = @transform_0, window_bounds = array<i64: 256, 36>}, {pipeline_mode = #tpu.pipeline_mode<synchronous>, transform_indices = @transform_1, window_bounds = array<i64: 36, 4>}, {transform_indices = @transform_2, window_bounds = array<i64: 256, 4>}, {transform_indices = @transform_3, window_bounds = array<i64: 1, 8, 4>}, {transform_indices = @transform_4, window_bounds = array<i64: 1, 8, 4>}]} {
    %c0 = arith.constant 0 : index
    %c0_0 = arith.constant 0 : index
    %0 = vector.load %arg1[%c0, %c0_0] : memref<256x36xf32, #tpu.memory_space<vmem>>, vector<256x36xf32>
    %c0_1 = arith.constant 0 : index
    %c0_2 = arith.constant 0 : index
    %1 = vector.load %arg2[%c0_1, %c0_2] : memref<36x4xf32, #tpu.memory_space<vmem>>, vector<36x4xf32>
    %cst = arith.constant dense<0.000000e+00> : vector<256x4xf32>
    %2 = tpu.matmul %0, %1, %cst {dimension_numbers = #tpu.dot_dimension_numbers<[1], [0], [0], [1], [0, 0, 1, 1], [], []>} : vector<256x36xf32>, vector<36x4xf32>, vector<256x4xf32> -> vector<256x4xf32>
    %c0_3 = arith.constant 0 : index
    %c0_4 = arith.constant 0 : index
    %3 = vector.load %arg3[%c0_3, %c0_4] : memref<256x4xf32, #tpu.memory_space<vmem>>, vector<256x4xf32>
    tpu.vector_store %arg3[%c0_3, %c0_4], %2 {strides = array<i32>} : memref<256x4xf32, #tpu.memory_space<vmem>>, vector<256x4xf32>,
    %cst_5 = arith.constant dense<0.000000e+00> : vector<4xf32>
    %4 = vector.multi_reduction <add>, %2, %cst_5 [0] : vector<256x4xf32> to vector<4xf32>
    %5 = vector.shape_cast %4 : vector<4xf32> to vector<1x4xf32>
    %6 = arith.mulf %2, %2 : vector<256x4xf32>
    %cst_6 = arith.constant dense<0.000000e+00> : vector<4xf32>
    %7 = vector.multi_reduction <add>, %6, %cst_6 [0] : vector<256x4xf32> to vector<4xf32>
    %8 = vector.shape_cast %7 : vector<4xf32> to vector<1x4xf32>
    %9 = vector.shape_cast %5 : vector<1x4xf32> to vector<1x1x4xf32>
    %10 = vector.shape_cast %9 : vector<1x1x4xf32> to vector<1x1x4xf32>
    %11 = vector.broadcast %10 : vector<1x1x4xf32> to vector<1x8x4xf32>
    %c0_7 = arith.constant 0 : index
    %c0_8 = arith.constant 0 : index
    %c0_9 = arith.constant 0 : index
    %12 = vector.load %arg4[%c0_7, %c0_8, %c0_9] : memref<1x8x4xf32, #tpu.memory_space<vmem>>, vector<1x8x4xf32>
    tpu.vector_store %arg4[%c0_7, %c0_8, %c0_9], %11 {strides = array<i32>} : memref<1x8x4xf32, #tpu.memory_space<vmem>>, vector<1x8x4xf32>,
    %13 = vector.shape_cast %8 : vector<1x4xf32> to vector<1x1x4xf32>
    %14 = vector.shape_cast %13 : vector<1x1x4xf32> to vector<1x1x4xf32>
    %15 = vector.broadcast %14 : vector<1x1x4xf32> to vector<1x8x4xf32>
    %c0_10 = arith.constant 0 : index
    %c0_11 = arith.constant 0 : index
    %c0_12 = arith.constant 0 : index
    %16 = vector.load %arg5[%c0_10, %c0_11, %c0_12] : memref<1x8x4xf32, #tpu.memory_space<vmem>>, vector<1x8x4xf32>
    tpu.vector_store %arg5[%c0_10, %c0_11, %c0_12], %15 {strides = array<i32>} : memref<1x8x4xf32, #tpu.memory_space<vmem>>, vector<1x8x4xf32>,
    return
  }
  func.func @transform_0(%arg0: i32) -> (i32, i32) {
    %c0_i32 = arith.constant 0 : i32
    %c0_i32_0 = arith.constant 0 : i32
    return %arg0, %c0_i32 : i32, i32
  }
  func.func @transform_1(%arg0: i32) -> (i32, i32) {
    %c0_i32 = arith.constant 0 : i32
    %c0_i32_0 = arith.constant 0 : i32
    %c0_i32_1 = arith.constant 0 : i32
    return %c0_i32, %c0_i32_0 : i32, i32
  }
  func.func @transform_2(%arg0: i32) -> (i32, i32) {
    %c0_i32 = arith.constant 0 : i32
    %c0_i32_0 = arith.constant 0 : i32
    return %arg0, %c0_i32 : i32, i32
  }
  func.func @transform_3(%arg0: i32) -> (i32, i32, i32) {
    %c0_i32 = arith.constant 0 : i32
    %c0_i32_0 = arith.constant 0 : i32
    %c0_i32_1 = arith.constant 0 : i32
    return %arg0, %c0_i32, %c0_i32_0 : i32, i32, i32
  }
  func.func @transform_4(%arg0: i32) -> (i32, i32, i32) {
    %c0_i32 = arith.constant 0 : i32
    %c0_i32_0 = arith.constant 0 : i32
    %c0_i32_1 = arith.constant 0 : i32
    return %arg0, %c0_i32, %c0_i32_0 : i32, i32, i32
  }
}

</mosaic_0001>

<llo_original>
// kernel: tpu_custom_call.1
$region0: #{tpu_custom_call.1}
  #allocation0 [shape = 'u32[]', space=smem, size = 0x4, offset = 0x4, fixed_abs, tag = 'smem constant byte address 0x4 - core index']
  #allocation1 [shape = 'u32[144,128]{1,0:T(1,128)}', space=vmem, size = 0x12000, scoped, tag = 'internal scratch']
  %s0 = inlined_call_operand.vmem [shape: f32[512,36], index: 0, kind: input, shape index: {}]
  %s1 = inlined_call_operand.vmem [shape: f32[36,4], index: 1, kind: input, shape index: {}]
  %s2 = inlined_call_operand.vmem [shape: f32[512,4], index: 2, kind: output, shape index: {0}]
  %s3 = inlined_call_operand.vmem [shape: f32[2,8,4], index: 3, kind: output, shape index: {1}]
  %s4 = inlined_call_operand.vmem [shape: f32[2,8,4], index: 4, kind: output, shape index: {2}]
  %5 = xla_tuple %s2, %s3, %s4
  %s6 = sld [smem:[#allocation0]]
  $region57: #{tpu_custom_call.1} parent=0
    _
  %s8 = ssub.s32 1, %s6
  %s9 = scalar_select 0, %s8, %s6
  loop: start=0, step=1, limit=4
  $region2: #{tpu_custom_call.1} parent=0 // loop_pre_header
    _
  $region3: #{tpu_custom_call.1} parent=0 // loop_header
    %s11 = sphi 0, %s15
    %p12 = scmp.ge.s32.totalorder %s11, 4
    %s21 = sphi 0, %s23
    %s24 = sphi 0, %s21
    %s25 = sphi 0, %s24
    %s41 = sphi 0, %s25
    %s45 = sphi 0, %s45
    %s47 = sphi 0, %s45
    %s48 = sphi 0, %s47
    %s62 = sphi 0, %s48
    %s68 = sphi 0, %s70
    %s71 = sphi 0, %s68
    %s72 = sphi 0, %s71
    %s88 = sphi 0, %s72
    %s94 = sphi 0, %s96
    %s97 = sphi 0, %s94
    %s98 = sphi 0, %s97
    %s114 = sphi 0, %s98
    %s120 = sphi 0, %s122
    %s123 = sphi 0, %s120
    %s124 = sphi 0, %s123
    %s140 = sphi 0, %s124
  $region4: #{tpu_custom_call.1} parent=0 // loop_header_branch
    %14 = sbr.rel (%p12) target = $region8
  $region5: #{tpu_custom_call.1} parent=0 // loop_body
    %s16 = ssub.s32 %s11, 1
    %s17 = ssub.s32 %s11, 2
    %s18 = sadd.s32 %s11, 1
    %s19 = ssub.s32 %s11, %s18
    %p20 = scmp.eq.s32.totalorder %s19, 0
    %s22 = sadd.s32 %s21, 1
    %s23 = scalar_select %p20, %s21, %s22
    %p26 = pneg %p20
    %p27 = scmp.eq.s32.totalorder %s11, 1
    %p28 = por %p26, %p27
    %p29 = scmp.ne.s32.totalorder %s21, %s24
    %p30 = scmp.eq.s32.totalorder %s11, 0
    %p31 = por %p29, %p30
    %p32 = scmp.ne.s32.totalorder %s21, %s24
    %p33 = scmp.eq.s32.totalorder %s16, 1
    %p34 = por %p32, %p33
    %p35 = scmp.ne.s32.totalorder %s24, %s25
    %p36 = scmp.eq.s32.totalorder %s16, 0
    %p37 = por %p35, %p36
    %p38 = scmp.ne.s32.totalorder %s24, %s25
    %p39 = scmp.eq.s32.totalorder %s17, 1
    %p40 = por %p38, %p39
    %p42 = scmp.ne.s32.totalorder %s25, %s41
    %p43 = scmp.eq.s32.totalorder %s17, 0
    %p44 = por %p42, %p43
    %s46 = sadd.s32 %s45, 1
    %p49 = scmp.eq.s32.totalorder %s11, 1
    %p50 = scmp.ne.s32.totalorder %s45, %s47
    %p51 = scmp.eq.s32.totalorder %s11, 0
    %p52 = por %p50, %p51
    %p53 = scmp.ne.s32.totalorder %s45, %s47
    %p54 = scmp.eq.s32.totalorder %s16, 1
    %p55 = por %p53, %p54
    %p56 = scmp.ne.s32.totalorder %s47, %s48
    %p57 = scmp.eq.s32.totalorder %s16, 0
    %p58 = por %p56, %p57
    %p59 = scmp.ne.s32.totalorder %s47, %s48
    %p60 = scmp.eq.s32.totalorder %s17, 1
    %p61 = por %p59, %p60
    %p63 = scmp.ne.s32.totalorder %s48, %s62
    %p64 = scmp.eq.s32.totalorder %s17, 0
    %p65 = por %p63, %p64
    %s66 = ssub.s32 %s11, %s18
    %p67 = scmp.eq.s32.totalorder %s66, 0
    %s69 = sadd.s32 %s68, 1
    %s70 = scalar_select %p67, %s68, %s69
    %p73 = pneg %p67
    %p74 = scmp.eq.s32.totalorder %s11, 1
    %p75 = por %p73, %p74
    %p76 = scmp.ne.s32.totalorder %s68, %s71
    %p77 = scmp.eq.s32.totalorder %s11, 0
    %p78 = por %p76, %p77
    %p79 = scmp.ne.s32.totalorder %s68, %s71
    %p80 = scmp.eq.s32.totalorder %s16, 1
    %p81 = por %p79, %p80
    %p82 = scmp.ne.s32.totalorder %s71, %s72
    %p83 = scmp.eq.s32.totalorder %s16, 0
    %p84 = por %p82, %p83
    %p85 = scmp.ne.s32.totalorder %s71, %s72
    %p86 = scmp.eq.s32.totalorder %s17, 1
    %p87 = por %p85, %p86
    %p89 = scmp.ne.s32.totalorder %s72, %s88
    %p90 = scmp.eq.s32.totalorder %s17, 0
    %p91 = por %p89, %p90
    %s92 = ssub.s32 %s11, %s18
    %p93 = scmp.eq.s32.totalorder %s92, 0
    %s95 = sadd.s32 %s94, 1
    %s96 = scalar_select %p93, %s94, %s95
    %p99 = pneg %p93
    %p100 = scmp.eq.s32.totalorder %s11, 1
    %p101 = por %p99, %p100
    %p102 = scmp.ne.s32.totalorder %s94, %s97
    %p103 = scmp.eq.s32.totalorder %s11, 0
    %p104 = por %p102, %p103
    %p105 = scmp.ne.s32.totalorder %s94, %s97
    %p106 = scmp.eq.s32.totalorder %s16, 1
    %p107 = por %p105, %p106
    %p108 = scmp.ne.s32.totalorder %s97, %s98
    %p109 = scmp.eq.s32.totalorder %s16, 0
    %p110 = por %p108, %p109
    %p111 = scmp.ne.s32.totalorder %s97, %s98
    %p112 = scmp.eq.s32.totalorder %s17, 1
    %p113 = por %p111, %p112
    %p115 = scmp.ne.s32.totalorder %s98, %s114
    %p116 = scmp.eq.s32.totalorder %s17, 0
    %p117 = por %p115, %p116
    %s118 = ssub.s32 %s11, %s18
    %p119 = scmp.eq.s32.totalorder %s118, 0
    %s121 = sadd.s32 %s120, 1
    %s122 = scalar_select %p119, %s120, %s121
    %p125 = pneg %p119
    %p126 = scmp.eq.s32.totalorder %s11, 1
    %p127 = por %p125, %p126
    %p128 = scmp.ne.s32.totalorder %s120, %s123
    %p129 = scmp.eq.s32.totalorder %s11, 0
    %p130 = por %p128, %p129
    %p131 = scmp.ne.s32.totalorder %s120, %s123
    %p132 = scmp.eq.s32.totalorder %s16, 1
    %p133 = por %p131, %p132
    %p134 = scmp.ne.s32.totalorder %s123, %s124
    %p135 = scmp.eq.s32.totalorder %s16, 0
    %p136 = por %p134, %p135
    %p137 = scmp.ne.s32.totalorder %s123, %s124
    %p138 = scmp.eq.s32.totalorder %s17, 1
    %p139 = por %p137, %p138
    %p141 = scmp.ne.s32.totalorder %s124, %s140
    %p142 = scmp.eq.s32.totalorder %s17, 0
    %p143 = por %p141, %p142
    %p144 = scmp.le.s32.totalorder 1, %s11
    %p145 = scmp.lt.s32.totalorder %s11, 3
    %p146 = pnand %p144, %p145
    %p147 = pneg %p146
    // Predicated region
    $region9: #{tpu_custom_call.1} parent=5 // pred_check
      _
    $region10: #{tpu_custom_call.1} parent=5 // pred_check_branch
      %149 = sbr.rel (%p146) target = $region12
    $region11: #{tpu_custom_call.1} parent=5 // pred_region
      %s150 = ssub.s32 %s11, 1
      // Predicated region
      $region13: #{tpu_custom_call.1} parent=11 // pred_check
        %p151 = pneg %p58
      $region14: #{tpu_custom_call.1} parent=11 // pred_check_branch
        %153 = sbr.rel (%p151) target = $region16
      $region15: #{tpu_custom_call.1} parent=11 // pred_region
        _
      $region16: #{tpu_custom_call.1} parent=11 // pred_fallthru
        _
    $region12: #{tpu_custom_call.1} parent=5 // pred_fallthru
      _
    %p154 = scmp.lt.s32.totalorder %s11, 2
    // Predicated region
    $region17: #{tpu_custom_call.1} parent=5 // pred_check
      %p155 = pneg %p154
    $region18: #{tpu_custom_call.1} parent=5 // pred_check_branch
      %157 = sbr.rel (%p155) target = $region20
    $region19: #{tpu_custom_call.1} parent=5 // pred_region
      // Predicated region
      $region21: #{tpu_custom_call.1} parent=19 // pred_check
        %p158 = pneg %p31
      $region22: #{tpu_custom_call.1} parent=19 // pred_check_branch
        %160 = sbr.rel (%p158) target = $region24
      $region23: #{tpu_custom_call.1} parent=19 // pred_region
        %s161 = smul.u32 32, %s11
        %p162 = scmp.lt.s32.totalorder %s161, 63
        %s163 = scalar_select %p162, %s161, 63
        %s164 = smul.addr %s163, 8
        %s165 = scalar_lea.vmem %s0, %s164
        %s166 = smul.u32 32, %s11
      $region24: #{tpu_custom_call.1} parent=19 // pred_fallthru
        _
    $region20: #{tpu_custom_call.1} parent=5 // pred_fallthru
      _
    %p167 = scmp.le.s32.totalorder 1, %s11
    %p168 = scmp.lt.s32.totalorder %s11, 3
    %p169 = pnand %p167, %p168
    %p170 = pneg %p169
    // Predicated region
    $region25: #{tpu_custom_call.1} parent=5 // pred_check
      _
    $region26: #{tpu_custom_call.1} parent=5 // pred_check_branch
      %172 = sbr.rel (%p169) target = $region28
    $region27: #{tpu_custom_call.1} parent=5 // pred_region
      %s173 = ssub.s32 %s11, 1
      %s174 = smul.u32 32, %s16
      %p175 = scmp.lt.s32.totalorder %s174, 63
      %s176 = scalar_select %p175, %s174, 63
      %s177 = smul.addr %s176, 8
      %s178 = scalar_lea.vmem %s0, %s177
      %p179 = pneg %p37
      %p180 = pneg %p34
      %p181 = pneg %p58
      %p182 = pneg %p55
      %p183 = pneg %p84
      %p184 = pneg %p81
      %s185 = smul.u32 32, %s16
      %p186 = scmp.lt.s32.totalorder %s185, 63
      %s187 = scalar_select %p186, %s185, 63
      %s188 = smul.addr %s187, 8
      %s189 = scalar_lea.vmem %s2, %s188
      %p190 = pneg %p110
      %p191 = pneg %p107
      %p192 = scmp.lt.s32.totalorder %s16, 1
      %s193 = scalar_select %p192, %s16, 1
      %s194 = smul.addr %s193, 8
      %s195 = scalar_lea.vmem %s3, %s194
      %p196 = pneg %p136
      %p197 = pneg %p133
      %p198 = scmp.lt.s32.totalorder %s16, 1
      %s199 = scalar_select %p198, %s16, 1
      %s200 = smul.addr %s199, 8
      %s201 = scalar_lea.vmem %s4, %s200
      %s202 = smul.u32 32, %s16
      %p203 = scmp.lt.s32.totalorder %s202, 63
      %s204 = scalar_select %p203, %s202, 63
      %s205 = smul.addr %s204, 8
      %s206 = scalar_lea.vmem %s0, %s205
      %s207 = smul.u32 32, %s16
      %s208 = smul.u32 32, %s16
      %p209 = scmp.lt.s32.totalorder %s208, 63
      %s210 = scalar_select %p209, %s208, 63
      %s211 = smul.addr %s210, 8
      %s212 = scalar_lea.vmem %s2, %s211
      %s213 = smul.u32 32, %s16
      %p214 = scmp.lt.s32.totalorder %s16, 1
      %s215 = scalar_select %p214, %s16, 1
      %s216 = smul.addr %s215, 8
      %s217 = scalar_lea.vmem %s3, %s216
      %p218 = scmp.lt.s32.totalorder %s16, 1
      %s219 = scalar_select %p218, %s16, 1
      %s220 = smul.addr %s219, 8
      %s221 = scalar_lea.vmem %s4, %s220
      %v222 = vld [vmem:[%s206] sm:$0xff]
      %v223 = vld [vmem:[%s206 + $0x8] sm:$0xff]
      %v224 = vld [vmem:[%s206 + $0x10] sm:$0xff]
      %v225 = vld [vmem:[%s206 + $0x18] sm:$0xff]
      %v226 = vld [vmem:[%s206 + $0x20] sm:$0xff]
      %v227 = vld [vmem:[%s206 + $0x28] sm:$0xff]
      %v228 = vld [vmem:[%s206 + $0x30] sm:$0xff]
      %v229 = vld [vmem:[%s206 + $0x38] sm:$0xff]
      %v230 = vld [vmem:[%s206 + $0x40] sm:$0xff]
      %v231 = vld [vmem:[%s206 + $0x48] sm:$0xff]
      %v232 = vld [vmem:[%s206 + $0x50] sm:$0xff]
      %v233 = vld [vmem:[%s206 + $0x58] sm:$0xff]
      %v234 = vld [vmem:[%s206 + $0x60] sm:$0xff]
      %v235 = vld [vmem:[%s206 + $0x68] sm:$0xff]
      %v236 = vld [vmem:[%s206 + $0x70] sm:$0xff]
      %v237 = vld [vmem:[%s206 + $0x78] sm:$0xff]
      %v238 = vld [vmem:[%s206 + $0x80] sm:$0xff]
      %v239 = vld [vmem:[%s206 + $0x88] sm:$0xff]
      %v240 = vld [vmem:[%s206 + $0x90] sm:$0xff]
      %v241 = vld [vmem:[%s206 + $0x98] sm:$0xff]
      %v242 = vld [vmem:[%s206 + $0xa0] sm:$0xff]
      %v243 = vld [vmem:[%s206 + $0xa8] sm:$0xff]
      %v244 = vld [vmem:[%s206 + $0xb0] sm:$0xff]
      %v245 = vld [vmem:[%s206 + $0xb8] sm:$0xff]
      %v246 = vld [vmem:[%s206 + $0xc0] sm:$0xff]
      %v247 = vld [vmem:[%s206 + $0xc8] sm:$0xff]
      %v248 = vld [vmem:[%s206 + $0xd0] sm:$0xff]
      %v249 = vld [vmem:[%s206 + $0xd8] sm:$0xff]
      %v250 = vld [vmem:[%s206 + $0xe0] sm:$0xff]
      %v251 = vld [vmem:[%s206 + $0xe8] sm:$0xff]
      %v252 = vld [vmem:[%s206 + $0xf0] sm:$0xff]
      %v253 = vld [vmem:[%s206 + $0xf8] sm:$0xff]
      %v254 = vld [vmem:[%s1] sm:$0xff]
      %v255 = vld [vmem:[%s1 + $0x8] sm:$0xff]
      %v256 = vld [vmem:[%s1 + $0x10] sm:$0xff]
      %v257 = vld [vmem:[%s1 + $0x18] sm:$0xff]
      %v258 = vld [vmem:[%s1 + $0x20] sm:$0xf]
      %vm259 = vcmask 293888
      %v261 = vsel %vm259, %v222, 0
      %v264 = vsel %vm259, %v223, 0
      %v267 = vsel %vm259, %v224, 0
      %v270 = vsel %vm259, %v225, 0
      %v273 = vsel %vm259, %v226, 0
      %v276 = vsel %vm259, %v227, 0
      %v279 = vsel %vm259, %v228, 0
      %v282 = vsel %vm259, %v229, 0
      %v285 = vsel %vm259, %v230, 0
      %v288 = vsel %vm259, %v231, 0
      %v291 = vsel %vm259, %v232, 0
      %v294 = vsel %vm259, %v233, 0
      %v297 = vsel %vm259, %v234, 0
      %v300 = vsel %vm259, %v235, 0
      %v303 = vsel %vm259, %v236, 0
      %v306 = vsel %vm259, %v237, 0
      %v309 = vsel %vm259, %v238, 0
      %v312 = vsel %vm259, %v239, 0
      %v315 = vsel %vm259, %v240, 0
      %v318 = vsel %vm259, %v241, 0
      %v321 = vsel %vm259, %v242, 0
      %v324 = vsel %vm259, %v243, 0
      %v327 = vsel %vm259, %v244, 0
      %v330 = vsel %vm259, %v245, 0
      %v333 = vsel %vm259, %v246, 0
      %v336 = vsel %vm259, %v247, 0
      %v339 = vsel %vm259, %v248, 0
      %v342 = vsel %vm259, %v249, 0
      %v345 = vsel %vm259, %v250, 0
      %v348 = vsel %vm259, %v251, 0
      %v351 = vsel %vm259, %v252, 0
      %v354 = vsel %vm259, %v253, 0
      %vm356 = vcmask 1043456
      %v358 = vsel %vm356, %v258, 0
      %360 = vmatprep.subr.mxu0 0.0
      %361 = vmatpush1.msra.mxu0 %v254
      %362 = vmatprep.subr.mxu0 0.0
      %363 = vmatpush1.msra.mxu0 %v255
      %364 = vmatprep.subr.mxu0 0.0
      %365 = vmatpush1.msra.mxu0 %v256
      %366 = vmatprep.subr.mxu0 0.0
      %367 = vmatpush1.msra.mxu0 %v257
      %368 = vmatprep.subr.mxu0 0.0
      %369 = vmatpush1.msra.mxu0 %v358
      %370 = vmatprep.subr.mxu0 0.0
      %371 = vmatpush1.msra.mxu0 0.0
      %372 = vmatprep.subr.mxu0 0.0
      %373 = vmatpush1.msra.mxu0 0.0
      %374 = vmatprep.subr.mxu0 0.0
      %375 = vmatpush1.msra.mxu0 0.0
      %376 = vmatprep.subr.mxu0 0.0
      %377 = vmatpush1.msra.mxu0 0.0
      %378 = vmatprep.subr.mxu0 0.0
      %379 = vmatpush1.msra.mxu0 0.0
      %380 = vmatprep.subr.mxu0 0.0
      %381 = vmatpush1.msra.mxu0 0.0
      %382 = vmatprep.subr.mxu0 0.0
      %383 = vmatpush1.msra.mxu0 0.0
      %384 = vmatprep.subr.mxu0 0.0
      %385 = vmatpush1.msra.mxu0 0.0
      %386 = vmatprep.subr.mxu0 0.0
      %387 = vmatpush1.msra.mxu0 0.0
      %388 = vmatprep.subr.mxu0 0.0
      %389 = vmatpush1.msra.mxu0 0.0
      %390 = vmatprep.subr.mxu0 0.0
      %391 = vmatpush1.msra.mxu0 0.0
      %392 = vmatprep.subr.mxu0 0.0
      %393 = vmatpush1.msra.mxu0 0.0
      %394 = vmatprep.subr.mxu0 0.0
      %395 = vmatpush1.msra.mxu0 0.0
      %396 = vmatprep.subr.mxu0 0.0
      %397 = vmatpush1.msra.mxu0 0.0
      %398 = vmatprep.subr.mxu0 0.0
      %399 = vmatpush1.msra.mxu0 0.0
      %400 = vmatprep.subr.mxu0 0.0
      %401 = vmatpush1.msra.mxu0 0.0
      %402 = vmatprep.subr.mxu0 0.0
      %403 = vmatpush1.msra.mxu0 0.0
      %404 = vmatprep.subr.mxu0 0.0
      %405 = vmatpush1.msra.mxu0 0.0
      %406 = vmatprep.subr.mxu0 0.0
      %407 = vmatpush1.msra.mxu0 0.0
      %408 = vmatprep.subr.mxu0 0.0
      %409 = vmatpush1.msra.mxu0 0.0
      %410 = vmatprep.subr.mxu0 0.0
      %411 = vmatpush1.msra.mxu0 0.0
      %412 = vmatprep.subr.mxu0 0.0
      %413 = vmatpush1.msra.mxu0 0.0
      %414 = vmatprep.subr.mxu0 0.0
      %415 = vmatpush1.msra.mxu0 0.0
      %416 = vmatprep.subr.mxu0 0.0
      %417 = vmatpush1.msra.mxu0 0.0
      %418 = vmatprep.subr.mxu0 0.0
      %419 = vmatpush1.msra.mxu0 0.0
      %420 = vmatprep.subr.mxu0 0.0
      %421 = vmatpush1.msra.mxu0 0.0
      %422 = vmatprep.subr.mxu0 0.0
      %423 = vmatpush1.msra.mxu0 0.0
      %424 = vmatprep.mubr.f32.mxu0 0.0
      %425 = vmatmul.mubr.f32.gmra.mrb[0].mxu0 %v261
      %v426 = vpop.f32.mrb[0].mxu0
      %v427 = vadd.f32 0.0, %v426
      %v428 = vpop.f32.mrb[0].mxu0
      %429 = vmatprep.mubr.f32.mxu0 0.0
      %430 = vmatmul.mubr.f32.gmra.mrb[0].mxu0 %v264
      %v431 = vpop.f32.mrb[0].mxu0
      %v432 = vadd.f32 0.0, %v431
      %v433 = vpop.f32.mrb[0].mxu0
      %434 = vmatprep.mubr.f32.mxu0 0.0
      %435 = vmatmul.mubr.f32.gmra.mrb[0].mxu0 %v267
      %v436 = vpop.f32.mrb[0].mxu0
      %v437 = vadd.f32 0.0, %v436
      %v438 = vpop.f32.mrb[0].mxu0
      %439 = vmatprep.mubr.f32.mxu0 0.0
      %440 = vmatmul.mubr.f32.gmra.mrb[0].mxu0 %v270
      %v441 = vpop.f32.mrb[0].mxu0
      %v442 = vadd.f32 0.0, %v441
      %v443 = vpop.f32.mrb[0].mxu0
      %444 = vmatprep.mubr.f32.mxu0 0.0
      %445 = vmatmul.mubr.f32.gmra.mrb[0].mxu0 %v273
      %v446 = vpop.f32.mrb[0].mxu0
      %v447 = vadd.f32 0.0, %v446
      %v448 = vpop.f32.mrb[0].mxu0
      %449 = vmatprep.mubr.f32.mxu0 0.0
      %450 = vmatmul.mubr.f32.gmra.mrb[0].mxu0 %v276
      %v451 = vpop.f32.mrb[0].mxu0
      %v452 = vadd.f32 0.0, %v451
      %v453 = vpop.f32.mrb[0].mxu0
      %454 = vmatprep.mubr.f32.mxu0 0.0
      %455 = vmatmul.mubr.f32.gmra.mrb[0].mxu0 %v279
      %v456 = vpop.f32.mrb[0].mxu0
      %v457 = vadd.f32 0.0, %v456
      %v458 = vpop.f32.mrb[0].mxu0
      %459 = vmatprep.mubr.f32.mxu0 0.0
      %460 = vmatmul.mubr.f32.gmra.mrb[0].mxu0 %v282
      %v461 = vpop.f32.mrb[0].mxu0
      %v462 = vadd.f32 0.0, %v461
      %v463 = vpop.f32.mrb[0].mxu0
      %464 = vmatprep.mubr.f32.mxu0 0.0
      %465 = vmatmul.mubr.f32.gmra.mrb[0].mxu0 %v285
      %v466 = vpop.f32.mrb[0].mxu0
      %v467 = vadd.f32 0.0, %v466
      %v468 = vpop.f32.mrb[0].mxu0
      %469 = vmatprep.mubr.f32.mxu0 0.0
      %470 = vmatmul.mubr.f32.gmra.mrb[0].mxu0 %v288
      %v471 = vpop.f32.mrb[0].mxu0
      %v472 = vadd.f32 0.0, %v471
      %v473 = vpop.f32.mrb[0].mxu0
      %474 = vmatprep.mubr.f32.mxu0 0.0
      %475 = vmatmul.mubr.f32.gmra.mrb[0].mxu0 %v291
      %v476 = vpop.f32.mrb[0].mxu0
      %v477 = vadd.f32 0.0, %v476
      %v478 = vpop.f32.mrb[0].mxu0
      %479 = vmatprep.mubr.f32.mxu0 0.0
      %480 = vmatmul.mubr.f32.gmra.mrb[0].mxu0 %v294
      %v481 = vpop.f32.mrb[0].mxu0
      %v482 = vadd.f32 0.0, %v481
      %v483 = vpop.f32.mrb[0].mxu0
      %484 = vmatprep.mubr.f32.mxu0 0.0
      %485 = vmatmul.mubr.f32.gmra.mrb[0].mxu0 %v297
      %v486 = vpop.f32.mrb[0].mxu0
      %v487 = vadd.f32 0.0, %v486
      %v488 = vpop.f32.mrb[0].mxu0
      %489 = vmatprep.mubr.f32.mxu0 0.0
      %490 = vmatmul.mubr.f32.gmra.mrb[0].mxu0 %v300
      %v491 = vpop.f32.mrb[0].mxu0
      %v492 = vadd.f32 0.0, %v491
      %v493 = vpop.f32.mrb[0].mxu0
      %494 = vmatprep.mubr.f32.mxu0 0.0
      %495 = vmatmul.mubr.f32.gmra.mrb[0].mxu0 %v303
      %v496 = vpop.f32.mrb[0].mxu0
      %v497 = vadd.f32 0.0, %v496
      %v498 = vpop.f32.mrb[0].mxu0
      %499 = vmatprep.mubr.f32.mxu0 0.0
      %500 = vmatmul.mubr.f32.gmra.mrb[0].mxu0 %v306
      %v501 = vpop.f32.mrb[0].mxu0
      %v502 = vadd.f32 0.0, %v501
      %v503 = vpop.f32.mrb[0].mxu0
      %504 = vmatprep.mubr.f32.mxu0 0.0
      %505 = vmatmul.mubr.f32.gmra.mrb[0].mxu0 %v309
      %v506 = vpop.f32.mrb[0].mxu0
      %v507 = vadd.f32 0.0, %v506
      %v508 = vpop.f32.mrb[0].mxu0
      %509 = vmatprep.mubr.f32.mxu0 0.0
      %510 = vmatmul.mubr.f32.gmra.mrb[0].mxu0 %v312
      %v511 = vpop.f32.mrb[0].mxu0
      %v512 = vadd.f32 0.0, %v511
      %v513 = vpop.f32.mrb[0].mxu0
      %514 = vmatprep.mubr.f32.mxu0 0.0
      %515 = vmatmul.mubr.f32.gmra.mrb[0].mxu0 %v315
      %v516 = vpop.f32.mrb[0].mxu0
      %v517 = vadd.f32 0.0, %v516
      %v518 = vpop.f32.mrb[0].mxu0
      %519 = vmatprep.mubr.f32.mxu0 0.0
      %520 = vmatmul.mubr.f32.gmra.mrb[0].mxu0 %v318
      %v521 = vpop.f32.mrb[0].mxu0
      %v522 = vadd.f32 0.0, %v521
      %v523 = vpop.f32.mrb[0].mxu0
      %524 = vmatprep.mubr.f32.mxu0 0.0
      %525 = vmatmul.mubr.f32.gmra.mrb[0].mxu0 %v321
      %v526 = vpop.f32.mrb[0].mxu0
      %v527 = vadd.f32 0.0, %v526
      %v528 = vpop.f32.mrb[0].mxu0
      %529 = vmatprep.mubr.f32.mxu0 0.0
      %530 = vmatmul.mubr.f32.gmra.mrb[0].mxu0 %v324
      %v531 = vpop.f32.mrb[0].mxu0
      %v532 = vadd.f32 0.0, %v531
      %v533 = vpop.f32.mrb[0].mxu0
      %534 = vmatprep.mubr.f32.mxu0 0.0
      %535 = vmatmul.mubr.f32.gmra.mrb[0].mxu0 %v327
      %v536 = vpop.f32.mrb[0].mxu0
      %v537 = vadd.f32 0.0, %v536
      %v538 = vpop.f32.mrb[0].mxu0
      %539 = vmatprep.mubr.f32.mxu0 0.0
      %540 = vmatmul.mubr.f32.gmra.mrb[0].mxu0 %v330
      %v541 = vpop.f32.mrb[0].mxu0
      %v542 = vadd.f32 0.0, %v541
      %v543 = vpop.f32.mrb[0].mxu0
      %544 = vmatprep.mubr.f32.mxu0 0.0
      %545 = vmatmul.mubr.f32.gmra.mrb[0].mxu0 %v333
      %v546 = vpop.f32.mrb[0].mxu0
      %v547 = vadd.f32 0.0, %v546
      %v548 = vpop.f32.mrb[0].mxu0
      %549 = vmatprep.mubr.f32.mxu0 0.0
      %550 = vmatmul.mubr.f32.gmra.mrb[0].mxu0 %v336
      %v551 = vpop.f32.mrb[0].mxu0
      %v552 = vadd.f32 0.0, %v551
      %v553 = vpop.f32.mrb[0].mxu0
      %554 = vmatprep.mubr.f32.mxu0 0.0
      %555 = vmatmul.mubr.f32.gmra.mrb[0].mxu0 %v339
      %v556 = vpop.f32.mrb[0].mxu0
      %v557 = vadd.f32 0.0, %v556
      %v558 = vpop.f32.mrb[0].mxu0
      %559 = vmatprep.mubr.f32.mxu0 0.0
      %560 = vmatmul.mubr.f32.gmra.mrb[0].mxu0 %v342
      %v561 = vpop.f32.mrb[0].mxu0
      %v562 = vadd.f32 0.0, %v561
      %v563 = vpop.f32.mrb[0].mxu0
      %564 = vmatprep.mubr.f32.mxu0 0.0
      %565 = vmatmul.mubr.f32.gmra.mrb[0].mxu0 %v345
      %v566 = vpop.f32.mrb[0].mxu0
      %v567 = vadd.f32 0.0, %v566
      %v568 = vpop.f32.mrb[0].mxu0
      %569 = vmatprep.mubr.f32.mxu0 0.0
      %570 = vmatmul.mubr.f32.gmra.mrb[0].mxu0 %v348
      %v571 = vpop.f32.mrb[0].mxu0
      %v572 = vadd.f32 0.0, %v571
      %v573 = vpop.f32.mrb[0].mxu0
      %574 = vmatprep.mubr.f32.mxu0 0.0
      %575 = vmatmul.mubr.f32.gmra.mrb[0].mxu0 %v351
      %v576 = vpop.f32.mrb[0].mxu0
      %v577 = vadd.f32 0.0, %v576
      %v578 = vpop.f32.mrb[0].mxu0
      %579 = vmatprep.mubr.f32.mxu0 0.0
      %580 = vmatmul.mubr.f32.gmra.mrb[0].mxu0 %v354
      %v581 = vpop.f32.mrb[0].mxu0
      %v582 = vadd.f32 0.0, %v581
      %v583 = vpop.f32.mrb[0].mxu0
      %584 = vdwg.mxu0
      %vm585 = vcmask 31744
      %586 = vst.msk [vmem:[%s212] sm:$0xff] %vm585, %v427
      %587 = vst.msk [vmem:[%s212 + $0x8] sm:$0xff] %vm585, %v432
      %588 = vst.msk [vmem:[%s212 + $0x10] sm:$0xff] %vm585, %v437
      %589 = vst.msk [vmem:[%s212 + $0x18] sm:$0xff] %vm585, %v442
      %590 = vst.msk [vmem:[%s212 + $0x20] sm:$0xff] %vm585, %v447
      %591 = vst.msk [vmem:[%s212 + $0x28] sm:$0xff] %vm585, %v452
      %592 = vst.msk [vmem:[%s212 + $0x30] sm:$0xff] %vm585, %v457
      %593 = vst.msk [vmem:[%s212 + $0x38] sm:$0xff] %vm585, %v462
      %594 = vst.msk [vmem:[%s212 + $0x40] sm:$0xff] %vm585, %v467
      %595 = vst.msk [vmem:[%s212 + $0x48] sm:$0xff] %vm585, %v472
      %596 = vst.msk [vmem:[%s212 + $0x50] sm:$0xff] %vm585, %v477
      %597 = vst.msk [vmem:[%s212 + $0x58] sm:$0xff] %vm585, %v482
      %598 = vst.msk [vmem:[%s212 + $0x60] sm:$0xff] %vm585, %v487
      %599 = vst.msk [vmem:[%s212 + $0x68] sm:$0xff] %vm585, %v492
      %600 = vst.msk [vmem:[%s212 + $0x70] sm:$0xff] %vm585, %v497
      %601 = vst.msk [vmem:[%s212 + $0x78] sm:$0xff] %vm585, %v502
      %602 = vst.msk [vmem:[%s212 + $0x80] sm:$0xff] %vm585, %v507
      %603 = vst.msk [vmem:[%s212 + $0x88] sm:$0xff] %vm585, %v512
      %604 = vst.msk [vmem:[%s212 + $0x90] sm:$0xff] %vm585, %v517
      %605 = vst.msk [vmem:[%s212 + $0x98] sm:$0xff] %vm585, %v522
      %606 = vst.msk [vmem:[%s212 + $0xa0] sm:$0xff] %vm585, %v527
      %607 = vst.msk [vmem:[%s212 + $0xa8] sm:$0xff] %vm585, %v532
      %608 = vst.msk [vmem:[%s212 + $0xb0] sm:$0xff] %vm585, %v537
      %609 = vst.msk [vmem:[%s212 + $0xb8] sm:$0xff] %vm585, %v542
      %610 = vst.msk [vmem:[%s212 + $0xc0] sm:$0xff] %vm585, %v547
      %611 = vst.msk [vmem:[%s212 + $0xc8] sm:$0xff] %vm585, %v552
      %612 = vst.msk [vmem:[%s212 + $0xd0] sm:$0xff] %vm585, %v557
      %613 = vst.msk [vmem:[%s212 + $0xd8] sm:$0xff] %vm585, %v562
      %614 = vst.msk [vmem:[%s212 + $0xe0] sm:$0xff] %vm585, %v567
      %615 = vst.msk [vmem:[%s212 + $0xe8] sm:$0xff] %vm585, %v572
      %616 = vst.msk [vmem:[%s212 + $0xf0] sm:$0xff] %vm585, %v577
      %617 = vst.msk [vmem:[%s212 + $0xf8] sm:$0xff] %vm585, %v582
      %v618 = vsel %vm585, %v427, 0.0
      %v619 = vsel %vm585, %v432, 0.0
      %v620 = vadd.f32 %v618, %v619
      %v621 = vsel %vm585, %v437, 0.0
      %v622 = vadd.f32 %v620, %v621
      %v623 = vsel %vm585, %v442, 0.0
      %v624 = vadd.f32 %v622, %v623
      %v625 = vsel %vm585, %v447, 0.0
      %v626 = vadd.f32 %v624, %v625
      %v627 = vsel %vm585, %v452, 0.0
      %v628 = vadd.f32 %v626, %v627
      %v629 = vsel %vm585, %v457, 0.0
      %v630 = vadd.f32 %v628, %v629
      %v631 = vsel %vm585, %v462, 0.0
      %v632 = vadd.f32 %v630, %v631
      %v633 = vsel %vm585, %v467, 0.0
      %v634 = vadd.f32 %v632, %v633
      %v635 = vsel %vm585, %v472, 0.0
      %v636 = vadd.f32 %v634, %v635
      %v637 = vsel %vm585, %v477, 0.0
      %v638 = vadd.f32 %v636, %v637
      %v639 = vsel %vm585, %v482, 0.0
      %v640 = vadd.f32 %v638, %v639
      %v641 = vsel %vm585, %v487, 0.0
      %v642 = vadd.f32 %v640, %v641
      %v643 = vsel %vm585, %v492, 0.0
      %v644 = vadd.f32 %v642, %v643
      %v645 = vsel %vm585, %v497, 0.0
      %v646 = vadd.f32 %v644, %v645
      %v647 = vsel %vm585, %v502, 0.0
      %v648 = vadd.f32 %v646, %v647
      %v649 = vsel %vm585, %v507, 0.0
      %v650 = vadd.f32 %v648, %v649
      %v651 = vsel %vm585, %v512, 0.0
      %v652 = vadd.f32 %v650, %v651
      %v653 = vsel %vm585, %v517, 0.0
      %v654 = vadd.f32 %v652, %v653
      %v655 = vsel %vm585, %v522, 0.0
      %v656 = vadd.f32 %v654, %v655
      %v657 = vsel %vm585, %v527, 0.0
      %v658 = vadd.f32 %v656, %v657
      %v659 = vsel %vm585, %v532, 0.0
      %v660 = vadd.f32 %v658, %v659
      %v661 = vsel %vm585, %v537, 0.0
      %v662 = vadd.f32 %v660, %v661
      %v663 = vsel %vm585, %v542, 0.0
      %v664 = vadd.f32 %v662, %v663
      %v665 = vsel %vm585, %v547, 0.0
      %v666 = vadd.f32 %v664, %v665
      %v667 = vsel %vm585, %v552, 0.0
      %v668 = vadd.f32 %v666, %v667
      %v669 = vsel %vm585, %v557, 0.0
      %v670 = vadd.f32 %v668, %v669
      %v671 = vsel %vm585, %v562, 0.0
      %v672 = vadd.f32 %v670, %v671
      %v673 = vsel %vm585, %v567, 0.0
      %v674 = vadd.f32 %v672, %v673
      %v675 = vsel %vm585, %v572, 0.0
      %v676 = vadd.f32 %v674, %v675
      %v677 = vsel %vm585, %v577, 0.0
      %v678 = vadd.f32 %v676, %v677
      %v679 = vsel %vm585, %v582, 0.0
      %v680 = vadd.f32 %v678, %v679
      %v681 = vrot.slane %v680, 4
      %v682 = vadd.f32 %v680, %v681
      %v683 = vrot.slane %v682, 2
      %v684 = vadd.f32 %v682, %v683
      %v685 = vrot.slane %v684, 1
      %v686 = vadd.f32 %v684, %v685
      %v687 = vmul.f32 %v427, %v427
      %v688 = vmul.f32 %v432, %v432
      %v689 = vmul.f32 %v437, %v437
      %v690 = vmul.f32 %v442, %v442
      %v691 = vmul.f32 %v447, %v447
      %v692 = vmul.f32 %v452, %v452
      %v693 = vmul.f32 %v457, %v457
      %v694 = vmul.f32 %v462, %v462
      %v695 = vmul.f32 %v467, %v467
      %v696 = vmul.f32 %v472, %v472
      %v697 = vmul.f32 %v477, %v477
      %v698 = vmul.f32 %v482, %v482
      %v699 = vmul.f32 %v487, %v487
      %v700 = vmul.f32 %v492, %v492
      %v701 = vmul.f32 %v497, %v497
      %v702 = vmul.f32 %v502, %v502
      %v703 = vmul.f32 %v507, %v507
      %v704 = vmul.f32 %v512, %v512
      %v705 = vmul.f32 %v517, %v517
      %v706 = vmul.f32 %v522, %v522
      %v707 = vmul.f32 %v527, %v527
      %v708 = vmul.f32 %v532, %v532
      %v709 = vmul.f32 %v537, %v537
      %v710 = vmul.f32 %v542, %v542
      %v711 = vmul.f32 %v547, %v547
      %v712 = vmul.f32 %v552, %v552
      %v713 = vmul.f32 %v557, %v557
      %v714 = vmul.f32 %v562, %v562
      %v715 = vmul.f32 %v567, %v567
      %v716 = vmul.f32 %v572, %v572
      %v717 = vmul.f32 %v577, %v577
      %v718 = vmul.f32 %v582, %v582
      %v719 = vsel %vm585, %v687, 0.0
      %v720 = vsel %vm585, %v688, 0.0
      %v721 = vadd.f32 %v719, %v720
      %v722 = vsel %vm585, %v689, 0.0
      %v723 = vadd.f32 %v721, %v722
      %v724 = vsel %vm585, %v690, 0.0
      %v725 = vadd.f32 %v723, %v724
      %v726 = vsel %vm585, %v691, 0.0
      %v727 = vadd.f32 %v725, %v726
      %v728 = vsel %vm585, %v692, 0.0
      %v729 = vadd.f32 %v727, %v728
      %v730 = vsel %vm585, %v693, 0.0
      %v731 = vadd.f32 %v729, %v730
      %v732 = vsel %vm585, %v694, 0.0
      %v733 = vadd.f32 %v731, %v732
      %v734 = vsel %vm585, %v695, 0.0
      %v735 = vadd.f32 %v733, %v734
      %v736 = vsel %vm585, %v696, 0.0
      %v737 = vadd.f32 %v735, %v736
      %v738 = vsel %vm585, %v697, 0.0
      %v739 = vadd.f32 %v737, %v738
      %v740 = vsel %vm585, %v698, 0.0
      %v741 = vadd.f32 %v739, %v740
      %v742 = vsel %vm585, %v699, 0.0
      %v743 = vadd.f32 %v741, %v742
      %v744 = vsel %vm585, %v700, 0.0
      %v745 = vadd.f32 %v743, %v744
      %v746 = vsel %vm585, %v701, 0.0
      %v747 = vadd.f32 %v745, %v746
      %v748 = vsel %vm585, %v702, 0.0
      %v749 = vadd.f32 %v747, %v748
      %v750 = vsel %vm585, %v703, 0.0
      %v751 = vadd.f32 %v749, %v750
      %v752 = vsel %vm585, %v704, 0.0
      %v753 = vadd.f32 %v751, %v752
      %v754 = vsel %vm585, %v705, 0.0
      %v755 = vadd.f32 %v753, %v754
      %v756 = vsel %vm585, %v706, 0.0
      %v757 = vadd.f32 %v755, %v756
      %v758 = vsel %vm585, %v707, 0.0
      %v759 = vadd.f32 %v757, %v758
      %v760 = vsel %vm585, %v708, 0.0
      %v761 = vadd.f32 %v759, %v760
      %v762 = vsel %vm585, %v709, 0.0
      %v763 = vadd.f32 %v761, %v762
      %v764 = vsel %vm585, %v710, 0.0
      %v765 = vadd.f32 %v763, %v764
      %v766 = vsel %vm585, %v711, 0.0
      %v767 = vadd.f32 %v765, %v766
      %v768 = vsel %vm585, %v712, 0.0
      %v769 = vadd.f32 %v767, %v768
      %v770 = vsel %vm585, %v713, 0.0
      %v771 = vadd.f32 %v769, %v770
      %v772 = vsel %vm585, %v714, 0.0
      %v773 = vadd.f32 %v771, %v772
      %v774 = vsel %vm585, %v715, 0.0
      %v775 = vadd.f32 %v773, %v774
      %v776 = vsel %vm585, %v716, 0.0
      %v777 = vadd.f32 %v775, %v776
      %v778 = vsel %vm585, %v717, 0.0
      %v779 = vadd.f32 %v777, %v778
      %v780 = vsel %vm585, %v718, 0.0
      %v781 = vadd.f32 %v779, %v780
      %v782 = vrot.slane %v781, 4
      %v783 = vadd.f32 %v781, %v782
      %v784 = vrot.slane %v783, 2
      %v785 = vadd.f32 %v783, %v784
      %v786 = vrot.slane %v785, 1
      %v787 = vadd.f32 %v785, %v786
      %788 = vst.msk [vmem:[%s217] sm:$0xff] %vm585, %v686
      %789 = vst.msk [vmem:[%s221] sm:$0xff] %vm585, %v787
      %s790 = smul.u32 32, %s16
      %p791 = scmp.lt.s32.totalorder %s790, 63
      %s792 = scalar_select %p791, %s790, 63
      %s793 = smul.addr %s792, 8
      %s794 = scalar_lea.vmem %s2, %s793
      %p795 = scmp.lt.s32.totalorder %s16, 1
      %s796 = scalar_select %p795, %s16, 1
      %s797 = smul.addr %s796, 8
      %s798 = scalar_lea.vmem %s3, %s797
      %p799 = scmp.lt.s32.totalorder %s16, 1
      %s800 = scalar_select %p799, %s16, 1
      %s801 = smul.addr %s800, 8
      %s802 = scalar_lea.vmem %s4, %s801
      // Predicated region
      $region29: #{tpu_custom_call.1} parent=27 // pred_check
        %p803 = pneg %p81
      $region30: #{tpu_custom_call.1} parent=27 // pred_check_branch
        %805 = sbr.rel (%p803) target = $region32
      $region31: #{tpu_custom_call.1} parent=27 // pred_region
        %s806 = smul.u32 32, %s16
      $region32: #{tpu_custom_call.1} parent=27 // pred_fallthru
        _
      // Predicated region
      $region33: #{tpu_custom_call.1} parent=27 // pred_check
        %p807 = pneg %p107
      $region34: #{tpu_custom_call.1} parent=27 // pred_check_branch
        %809 = sbr.rel (%p807) target = $region36
      $region35: #{tpu_custom_call.1} parent=27 // pred_region
        _
      $region36: #{tpu_custom_call.1} parent=27 // pred_fallthru
        _
      // Predicated region
      $region37: #{tpu_custom_call.1} parent=27 // pred_check
        %p810 = pneg %p133
      $region38: #{tpu_custom_call.1} parent=27 // pred_check_branch
        %812 = sbr.rel (%p810) target = $region40
      $region39: #{tpu_custom_call.1} parent=27 // pred_region
        _
      $region40: #{tpu_custom_call.1} parent=27 // pred_fallthru
        _
    $region28: #{tpu_custom_call.1} parent=5 // pred_fallthru
      _
    %p813 = scmp.le.s32.totalorder 2, %s11
    // Predicated region
    $region41: #{tpu_custom_call.1} parent=5 // pred_check
      %p814 = pneg %p813
    $region42: #{tpu_custom_call.1} parent=5 // pred_check_branch
      %816 = sbr.rel (%p814) target = $region44
    $region43: #{tpu_custom_call.1} parent=5 // pred_region
      %s817 = ssub.s32 %s11, 2
      // Predicated region
      $region45: #{tpu_custom_call.1} parent=43 // pred_check
        %p818 = pneg %p87
      $region46: #{tpu_custom_call.1} parent=43 // pred_check_branch
        %820 = sbr.rel (%p818) target = $region48
      $region47: #{tpu_custom_call.1} parent=43 // pred_region
        %s821 = smul.u32 32, %s17
        %p822 = scmp.lt.s32.totalorder %s821, 63
        %s823 = scalar_select %p822, %s821, 63
        %s824 = smul.addr %s823, 8
        %s825 = scalar_lea.vmem %s2, %s824
      $region48: #{tpu_custom_call.1} parent=43 // pred_fallthru
        _
      // Predicated region
      $region49: #{tpu_custom_call.1} parent=43 // pred_check
        %p826 = pneg %p113
      $region50: #{tpu_custom_call.1} parent=43 // pred_check_branch
        %828 = sbr.rel (%p826) target = $region52
      $region51: #{tpu_custom_call.1} parent=43 // pred_region
        %p829 = scmp.lt.s32.totalorder %s17, 1
        %s830 = scalar_select %p829, %s17, 1
        %s831 = smul.addr %s830, 8
        %s832 = scalar_lea.vmem %s3, %s831
      $region52: #{tpu_custom_call.1} parent=43 // pred_fallthru
        _
      // Predicated region
      $region53: #{tpu_custom_call.1} parent=43 // pred_check
        %p833 = pneg %p139
      $region54: #{tpu_custom_call.1} parent=43 // pred_check_branch
        %835 = sbr.rel (%p833) target = $region56
      $region55: #{tpu_custom_call.1} parent=43 // pred_region
        %p836 = scmp.lt.s32.totalorder %s17, 1
        %s837 = scalar_select %p836, %s17, 1
        %s838 = smul.addr %s837, 8
        %s839 = scalar_lea.vmem %s4, %s838
      $region56: #{tpu_custom_call.1} parent=43 // pred_fallthru
        _
    $region44: #{tpu_custom_call.1} parent=5 // pred_fallthru
      _
  $region6: #{tpu_custom_call.1} parent=0 // loop_footer
    %s15 = sadd.s32 1, %s11
  $region7: #{tpu_custom_call.1} parent=0 // loop_footer_branch
    %10 = sbr.rel target = $region3
  $region8: #{tpu_custom_call.1} parent=0 // loop_exit
    _

</llo_original>
